<compile_context>
chip_gen: v7x
topology: tpu7x:2x2x1
jax: 0.10.0
libtpu: 0.0.40
codegen_flags: <defaults>
</compile_context>

<pallas_src>
import functools

import jax
import jax.numpy as jnp
from jax.experimental import pallas as pl
from jax.experimental.pallas import tpu as pltpu


def _round_up(x, m):
    return ((x + m - 1) // m) * m


def _vmem_buffer_budget_bytes():
    """Pipeline-buffer budget, conservative across v5e/v6e/v7x."""
    try:
        cap = int(getattr(pltpu.get_tpu_info(), "vmem_capacity_bytes", 64 << 20))
    except Exception:
        cap = 64 << 20  # assume the smallest physical VMEM (v7x per-TC)
    # Use at most half of physical VMEM for the double-buffered streams,
    # capped at 40 MiB (v5e/v6e) / 32 MiB (v7x), floored at 16 MiB.
    return max(16 << 20, min(cap // 2, 40 << 20))


def _per_row_buffer_bytes(num_atoms, prob_itemsize):
    """Double-buffered VMEM bytes per batch row across all pipelined streams."""
    n_lane = _round_up(num_atoms, 128)
    return (2 * 2 * n_lane * prob_itemsize   # 2 prob slabs x 2 pipeline buffers
            + 2 * 128 * 4                    # (tb, 3) scalars pad to (tb,128) f32
            + 2 * 128 * 4)                   # (tb, 1) output pads to (tb,128) f32


def _choose_batch_tile(bs, num_atoms, prob_itemsize):
    budget = _vmem_buffer_budget_bytes()
    per_row = _per_row_buffer_bytes(num_atoms, prob_itemsize)
    tb_budget = max(8, (budget // per_row) // 8 * 8)   # multiple of 8 sublanes
    return max(8, min(tb_budget, 32768, _round_up(bs, 8)))


def _clipped_var_risk_kernel(atom_ref, scalars_ref, curr_p_ref, next_p_ref,
                             out_ref, *, discount_factor, margin):
    # Loads; probs promoted to f32 inside the kernel (HBM may hold bf16).
    atoms = atom_ref[...]                                 # (1, N) f32
    sc = scalars_ref[...]                                 # (TB, 3) f32
    curr_p = curr_p_ref[...].astype(jnp.float32)          # (TB, N)
    next_p = next_p_ref[...].astype(jnp.float32)          # (TB, N)

    cost = sc[:, 0:1]                                     # (TB, 1)
    not_done = sc[:, 1:2]                                 # (TB, 1)
    thr = jnp.maximum(sc[:, 2:3], 0.0)                    # clamp(threshold, 0)

    # Hoist per-row algebra before the (TB,1) -> (TB,N) broadcast.
    base_curr = margin - thr                              # (TB, 1)
    base_next = cost + base_curr                          # (TB, 1)
    scale = discount_factor * not_done                    # (TB, 1)

    curr_av = atoms + base_curr                           # (TB, N)
    next_av = scale * atoms + base_next                   # (TB, N)

    cx = jnp.maximum(curr_av, 0.0)
    nx = jnp.maximum(next_av, 0.0)

    # Fused: single cross-lane reduction of the difference (f32 accumulate).
    d = nx * nx * next_p - cx * cx * curr_p               # (TB, N)
    out_ref[...] = jnp.sum(d, axis=1, keepdims=True)      # (TB, 1)


def clipped_var_risk(atom_values, curr_atom_probs, next_atom_probs,
                     cost, not_done, threshold, curr_return,
                     *, discount_factor, margin, batch_tile=None):
    """JAX/Pallas equivalent of ClippedVarRisk.forward (curr_return unused)."""
    bs, num_atoms = curr_atom_probs.shape
    assert atom_values.shape == (num_atoms,)
    assert next_atom_probs.shape == (bs, num_atoms)
    assert cost.shape == (bs, 1)
    assert not_done.shape == (bs, 1)
    assert threshold.shape == (bs, 1)
    assert curr_return.shape == (bs, 1)  # validated only; not used in compute

    prob_itemsize = jnp.dtype(curr_atom_probs.dtype).itemsize

    if batch_tile is None:
        tb = _choose_batch_tile(bs, num_atoms, prob_itemsize)
    else:
        tb = max(8, _round_up(int(batch_tile), 8))
        tb = min(tb, _round_up(bs, 8))
    grid_b = pl.cdiv(bs, tb)

    # Packed per-batch scalars: one small side stream instead of three.
    scalars = jnp.concatenate(
        [cost.astype(jnp.float32), not_done.astype(jnp.float32),
         threshold.astype(jnp.float32)], axis=1)          # (bs, 3)

    atoms_2d = atom_values.reshape(1, num_atoms).astype(jnp.float32)

    kernel = functools.partial(_clipped_var_risk_kernel,
                               discount_factor=float(discount_factor),
                               margin=float(margin))

    # Explicit scoped-VMEM limit sized to the chosen tile (+ slack), so the
    # large tile compiles on v5e's 16 MiB default and fits v7x's 64 MiB VMEM.
    n_lane = _round_up(num_atoms, 128)
    pipeline_bytes = tb * _per_row_buffer_bytes(num_atoms, prob_itemsize)
    pipeline_bytes += 2 * 8 * n_lane * 4                   # atoms (1,N) block
    vmem_limit = int(pipeline_bytes + (6 << 20))

    cost_estimate = pl.CostEstimate(
        flops=9 * bs * num_atoms,
        transcendentals=0,
        bytes_accessed=(2 * bs * num_atoms * prob_itemsize
                        + bs * 4 * 4          # packed scalars in + (bs,1) out
                        + num_atoms * 4))

    out = pl.pallas_call(
        kernel,
        out_shape=jax.ShapeDtypeStruct((grid_b * tb, 1), jnp.float32),
        grid=(grid_b,),
        in_specs=[
            pl.BlockSpec((1, num_atoms), lambda i: (0, 0)),     # atom values
            pl.BlockSpec((tb, 3), lambda i: (i, 0)),            # packed scalars
            pl.BlockSpec((tb, num_atoms), lambda i: (i, 0)),    # curr probs
            pl.BlockSpec((tb, num_atoms), lambda i: (i, 0)),    # next probs
        ],
        out_specs=pl.BlockSpec((tb, 1), lambda i: (i, 0)),
        compiler_params=pltpu.CompilerParams(
            dimension_semantics=("parallel",),
            vmem_limit_bytes=vmem_limit),
        cost_estimate=cost_estimate,
    )(atoms_2d, scalars, curr_atom_probs, next_atom_probs)

    # Boundary-block rows (bs..grid_b*tb) hold garbage by design; discard.
    return out[:bs]


def _reference(atom_values, curr_atom_probs, next_atom_probs,
               cost, not_done, threshold, curr_return,
               *, discount_factor, margin):
    thr = jnp.maximum(threshold.astype(jnp.float32), 0.0)
    atoms = atom_values.astype(jnp.float32)[None, :]
    curr_av = atoms - thr + margin
    next_av = (cost.astype(jnp.float32)
               + discount_factor * not_done.astype(jnp.float32) * atoms
               - thr + margin)
    cv = lambda av, p: jnp.sum(jnp.maximum(av, 0.0) ** 2
                               * p.astype(jnp.float32), axis=1, keepdims=True)
    return cv(next_av, next_atom_probs) - cv(curr_av, curr_atom_probs)


if __name__ == "__main__":
    key = jax.random.PRNGKey(0)
    bs, num_atoms = 8, 128
    discount_factor, margin = 0.99, 0.1

    ks = jax.random.split(key, 7)
    atom_values = jnp.linspace(-5.0, 5.0, num_atoms, dtype=jnp.float32)
    curr_logits = jax.random.normal(ks[0], (bs, num_atoms), jnp.float32)
    next_logits = jax.random.normal(ks[1], (bs, num_atoms), jnp.float32)
    curr_atom_probs = jax.nn.softmax(curr_logits, axis=-1)
    next_atom_probs = jax.nn.softmax(next_logits, axis=-1)
    cost = jax.random.uniform(ks[2], (bs, 1), jnp.float32)
    not_done = (jax.random.uniform(ks[3], (bs, 1)) > 0.2).astype(jnp.float32)
    threshold = jax.random.normal(ks[4], (bs, 1), jnp.float32)
    curr_return = jax.random.normal(ks[5], (bs, 1), jnp.float32)

    out = clipped_var_risk(atom_values, curr_atom_probs, next_atom_probs,
                           cost, not_done, threshold, curr_return,
                           discount_factor=discount_factor, margin=margin)
    out = jax.block_until_ready(out)

    ref = _reference(atom_values, curr_atom_probs, next_atom_probs,
                     cost, not_done, threshold, curr_return,
                     discount_factor=discount_factor, margin=margin)
    assert out.shape == (bs, 1)
    assert jnp.allclose(out, ref, atol=1e-5, rtol=1e-5)

    # Second check: non-tile-multiple batch + bf16 prob storage (exercises the
    # un-padded boundary-block path and in-kernel dtype promotion).
    bs2 = 21
    ks2 = jax.random.split(ks[6], 6)
    cp2 = jax.nn.softmax(jax.random.normal(ks2[0], (bs2, num_atoms)), -1).astype(jnp.bfloat16)
    np2 = jax.nn.softmax(jax.random.normal(ks2[1], (bs2, num_atoms)), -1).astype(jnp.bfloat16)
    cost2 = jax.random.uniform(ks2[2], (bs2, 1), jnp.float32)
    nd2 = (jax.random.uniform(ks2[3], (bs2, 1)) > 0.2).astype(jnp.float32)
    thr2 = jax.random.normal(ks2[4], (bs2, 1), jnp.float32)
    cr2 = jax.random.normal(ks2[5], (bs2, 1), jnp.float32)
    out2 = jax.block_until_ready(
        clipped_var_risk(atom_values, cp2, np2, cost2, nd2, thr2, cr2,
                         discount_factor=discount_factor, margin=margin,
                         batch_tile=16))
    ref2 = _reference(atom_values, cp2, np2, cost2, nd2, thr2, cr2,
                      discount_factor=discount_factor, margin=margin)
    assert out2.shape == (bs2, 1)
    assert jnp.allclose(out2, ref2, atol=1e-2, rtol=1e-2)  # bf16 storage tolerance

    print("KERNEL_OK")
</pallas_src>

<mosaic_0001>
module attributes {stable_mosaic.version = 11 : i64} {
  func.func @_clipped_var_risk_kernel(%arg0: i32, %arg1: memref<1x128xf32, #tpu.memory_space<vmem>>, %arg2: memref<8x3xf32, #tpu.memory_space<vmem>>, %arg3: memref<8x128xf32, #tpu.memory_space<vmem>>, %arg4: memref<8x128xf32, #tpu.memory_space<vmem>>, %arg5: memref<8x1xf32, #tpu.memory_space<vmem>>) attributes {dimension_semantics = [#tpu.dimension_semantics<parallel>], iteration_bounds = array<i64: 1>, scalar_prefetch = 0 : i64, scratch_operands = 0 : i64, tpu.core_type = #tpu.core_type<tc>, window_params = [{pipeline_mode = #tpu.pipeline_mode<synchronous>, transform_indices = @transform_0, window_bounds = array<i64: 1, 128>}, {transform_indices = @transform_1, window_bounds = array<i64: 8, 3>}, {transform_indices = @transform_2, window_bounds = array<i64: 8, 128>}, {transform_indices = @transform_3, window_bounds = array<i64: 8, 128>}, {transform_indices = @transform_4, window_bounds = array<i64: 8, 1>}]} {
    %c0 = arith.constant 0 : index
    %c0_0 = arith.constant 0 : index
    %0 = vector.load %arg1[%c0, %c0_0] : memref<1x128xf32, #tpu.memory_space<vmem>>, vector<1x128xf32>
    %c0_1 = arith.constant 0 : index
    %c0_2 = arith.constant 0 : index
    %1 = vector.load %arg2[%c0_1, %c0_2] : memref<8x3xf32, #tpu.memory_space<vmem>>, vector<8x3xf32>
    %c0_3 = arith.constant 0 : index
    %c0_4 = arith.constant 0 : index
    %2 = vector.load %arg3[%c0_3, %c0_4] : memref<8x128xf32, #tpu.memory_space<vmem>>, vector<8x128xf32>
    %c0_5 = arith.constant 0 : index
    %c0_6 = arith.constant 0 : index
    %3 = vector.load %arg4[%c0_5, %c0_6] : memref<8x128xf32, #tpu.memory_space<vmem>>, vector<8x128xf32>
    %4 = vector.extract_strided_slice %1 {offsets = [0, 0], sizes = [8, 1], strides = [1, 1]} : vector<8x3xf32> to vector<8x1xf32>
    %5 = vector.extract_strided_slice %1 {offsets = [0, 1], sizes = [8, 1], strides = [1, 1]} : vector<8x3xf32> to vector<8x1xf32>
    %6 = vector.extract_strided_slice %1 {offsets = [0, 2], sizes = [8, 1], strides = [1, 1]} : vector<8x3xf32> to vector<8x1xf32>
    %cst = arith.constant 0.000000e+00 : f32
    %7 = vector.broadcast %cst : f32 to vector<8x1xf32>
    %8 = arith.maximumf %6, %7 : vector<8x1xf32>
    %cst_7 = arith.constant 1.000000e-01 : f32
    %9 = vector.broadcast %cst_7 : f32 to vector<8x1xf32>
    %10 = arith.subf %9, %8 : vector<8x1xf32>
    %11 = arith.addf %4, %10 : vector<8x1xf32>
    %cst_8 = arith.constant 9.900000e-01 : f32
    %12 = vector.broadcast %cst_8 : f32 to vector<8x1xf32>
    %13 = arith.mulf %12, %5 : vector<8x1xf32>
    %14 = vector.broadcast %0 : vector<1x128xf32> to vector<8x128xf32>
    %15 = vector.broadcast %10 : vector<8x1xf32> to vector<8x128xf32>
    %16 = arith.addf %14, %15 : vector<8x128xf32>
    %17 = vector.broadcast %13 : vector<8x1xf32> to vector<8x128xf32>
    %18 = vector.broadcast %0 : vector<1x128xf32> to vector<8x128xf32>
    %19 = arith.mulf %17, %18 : vector<8x128xf32>
    %20 = vector.broadcast %11 : vector<8x1xf32> to vector<8x128xf32>
    %21 = arith.addf %19, %20 : vector<8x128xf32>
    %cst_9 = arith.constant 0.000000e+00 : f32
    %22 = vector.broadcast %cst_9 : f32 to vector<8x128xf32>
    %23 = arith.maximumf %16, %22 : vector<8x128xf32>
    %cst_10 = arith.constant 0.000000e+00 : f32
    %24 = vector.broadcast %cst_10 : f32 to vector<8x128xf32>
    %25 = arith.maximumf %21, %24 : vector<8x128xf32>
    %26 = arith.mulf %25, %25 : vector<8x128xf32>
    %27 = arith.mulf %26, %3 : vector<8x128xf32>
    %28 = arith.mulf %23, %23 : vector<8x128xf32>
    %29 = arith.mulf %28, %2 : vector<8x128xf32>
    %30 = arith.subf %27, %29 : vector<8x128xf32>
    %cst_11 = arith.constant dense<0.000000e+00> : vector<8xf32>
    %31 = vector.multi_reduction <add>, %30, %cst_11 [1] : vector<8x128xf32> to vector<8xf32>
    %32 = vector.shape_cast %31 : vector<8xf32> to vector<8x1xf32>
    %c0_12 = arith.constant 0 : index
    %c0_13 = arith.constant 0 : index
    %33 = vector.load %arg5[%c0_12, %c0_13] : memref<8x1xf32, #tpu.memory_space<vmem>>, vector<8x1xf32>
    tpu.vector_store %arg5[%c0_12, %c0_13], %32 {strides = array<i32>} : memref<8x1xf32, #tpu.memory_space<vmem>>, vector<8x1xf32>,
    return
  }
  func.func @transform_0(%arg0: i32) -> (i32, i32) {
    %c0_i32 = arith.constant 0 : i32
    %c0_i32_0 = arith.constant 0 : i32
    %c0_i32_1 = arith.constant 0 : i32
    return %c0_i32, %c0_i32_0 : i32, i32
  }
  func.func @transform_1(%arg0: i32) -> (i32, i32) {
    %c0_i32 = arith.constant 0 : i32
    %c0_i32_0 = arith.constant 0 : i32
    return %arg0, %c0_i32 : i32, i32
  }
  func.func @transform_2(%arg0: i32) -> (i32, i32) {
    %c0_i32 = arith.constant 0 : i32
    %c0_i32_0 = arith.constant 0 : i32
    return %arg0, %c0_i32 : i32, i32
  }
  func.func @transform_3(%arg0: i32) -> (i32, i32) {
    %c0_i32 = arith.constant 0 : i32
    %c0_i32_0 = arith.constant 0 : i32
    return %arg0, %c0_i32 : i32, i32
  }
  func.func @transform_4(%arg0: i32) -> (i32, i32) {
    %c0_i32 = arith.constant 0 : i32
    %c0_i32_0 = arith.constant 0 : i32
    return %arg0, %c0_i32 : i32, i32
  }
}

</mosaic_0001>

<llo_original>
// kernel: tpu_custom_call.1
$region0: #{tpu_custom_call.1}
  #allocation0 [shape = 'u32[]', space=smem, size = 0x4, offset = 0x4, fixed_abs, tag = 'smem constant byte address 0x4 - core index']
  #allocation1 [shape = 'u32[144,128]{1,0:T(1,128)}', space=vmem, size = 0x12000, scoped, tag = 'internal scratch']
  %s0 = inlined_call_operand.vmem [shape: f32[1,128], index: 0, kind: input, shape index: {}]
  %s1 = inlined_call_operand.vmem [shape: f32[8,3], index: 1, kind: input, shape index: {}]
  %s2 = inlined_call_operand.vmem [shape: f32[8,128], index: 2, kind: input, shape index: {}]
  %s3 = inlined_call_operand.vmem [shape: f32[8,128], index: 3, kind: input, shape index: {}]
  %s4 = inlined_call_operand.vmem [shape: f32[8,1], index: 4, kind: output, shape index: {}]
  %s5 = sld [smem:[#allocation0]]
  $region26: #{tpu_custom_call.1} parent=0
    _
  %s7 = ssub.s32 1, %s5
  %s8 = scalar_select 0, %s7, %s5
  // Predicated region
  $region2: #{tpu_custom_call.1} parent=0 // pred_check
    _
  $region3: #{tpu_custom_call.1} parent=0 // pred_check_branch
    %10 = sbr.rel (0) target = $region5
  $region4: #{tpu_custom_call.1} parent=0 // pred_region
    _
  $region5: #{tpu_custom_call.1} parent=0 // pred_fallthru
    _
  // Predicated region
  $region6: #{tpu_custom_call.1} parent=0 // pred_check
    _
  $region7: #{tpu_custom_call.1} parent=0 // pred_check_branch
    %12 = sbr.rel (0) target = $region9
  $region8: #{tpu_custom_call.1} parent=0 // pred_region
    _
  $region9: #{tpu_custom_call.1} parent=0 // pred_fallthru
    _
  // Predicated region
  $region10: #{tpu_custom_call.1} parent=0 // pred_check
    _
  $region11: #{tpu_custom_call.1} parent=0 // pred_check_branch
    %14 = sbr.rel (0) target = $region13
  $region12: #{tpu_custom_call.1} parent=0 // pred_region
    _
  $region13: #{tpu_custom_call.1} parent=0 // pred_fallthru
    _
  // Predicated region
  $region14: #{tpu_custom_call.1} parent=0 // pred_check
    _
  $region15: #{tpu_custom_call.1} parent=0 // pred_check_branch
    %16 = sbr.rel (0) target = $region17
  $region16: #{tpu_custom_call.1} parent=0 // pred_region
    _
  $region17: #{tpu_custom_call.1} parent=0 // pred_fallthru
    _
  %v17 = vld [vmem:[%s0] sm:$0x1]
  %v18 = vld [vmem:[%s1] sm:$0xff]
  %v19 = vld [vmem:[%s2] sm:$0xff]
  %v20 = vld [vmem:[%s3] sm:$0xff]
  %v21 = vmax.f32 %v18, 0.0
  %v22 = vsub.f32 0.1, %v21
  %24 = vrot.lane.b32.xlu0 %v22, 126
  %v25 = vpop.permute.xlu0 %24
  %v27 = vadd.f32 %v18, %v25
  %v28 = vmul.f32 %v18, 0.99
  %v30 = vlaneseq
  %v31 = vshrl.u32 %v30, 7
  %v32 = vsub.s32 0, %v31
  %v33 = vrot.slane %v17, %v32
  %35 = vset.pattern.permute.xlu0 2
  %36 = vperm.xlu0 %35, %v22
  %v37 = vpop.permute.xlu0 %36
  %v39 = vadd.f32 %v33, %v37
  %41 = vset.pattern.permute.xlu0 1
  %42 = vperm.xlu0 %41, %v28
  %v43 = vpop.permute.xlu0 %42
  %v45 = vmul.f32 %v43, %v33
  %47 = vset.pattern.permute.xlu0 0
  %48 = vperm.xlu0 %47, %v27
  %v49 = vpop.permute.xlu0 %48
  %v51 = vadd.f32 %v45, %v49
  %v52 = vmax.f32 %v39, 0.0
  %v53 = vmax.f32 %v51, 0.0
  %v54 = vmul.f32 %v53, %v53
  %v55 = vmul.f32 %v54, %v20
  %v56 = vmul.f32 %v52, %v52
  %v57 = vmul.f32 %v56, %v19
  %v58 = vsub.f32 %v55, %v57
  %59 = vadd.xlane.f32.xlu0 %v58
  %v60 = vpop.xlane.xlu0 %59
  %vm61 = vcmask 7168
  %62 = vst.msk [vmem:[%s4] sm:$0xff] %vm61, %v60
  // Predicated region
  $region18: #{tpu_custom_call.1} parent=0 // pred_check
    _
  $region19: #{tpu_custom_call.1} parent=0 // pred_check_branch
    %64 = sbr.rel (0) target = $region21
  $region20: #{tpu_custom_call.1} parent=0 // pred_region
    _
  $region21: #{tpu_custom_call.1} parent=0 // pred_fallthru
    _
  // Predicated region
  $region22: #{tpu_custom_call.1} parent=0 // pred_check
    _
  $region23: #{tpu_custom_call.1} parent=0 // pred_check_branch
    %66 = sbr.rel (0) target = $region25
  $region24: #{tpu_custom_call.1} parent=0 // pred_region
    _
  $region25: #{tpu_custom_call.1} parent=0 // pred_fallthru
    _

</llo_original>
